<compile_context>
chip_gen: v5e
topology: v5e:2x2
jax: 0.10.0
libtpu: 0.0.40
codegen_flags: <defaults>
</compile_context>

<pallas_src>
import jax
import jax.numpy as jnp
from jax.experimental import pallas as pl
from jax.experimental.pallas import tpu as pltpu

NUM_CLASSES = 10
PADDED_CLASSES = 128  # lane-dense output width / MXU N dim


def _round_up(x, m):
    return (x + m - 1) // m * m


def mlp_kernel(x_ref, w1t_ref, w2t_ref, w3t_ref, o_ref):
    # x_ref:   (TILE_M, D)    bf16 or f32 (per-tile block; cast to bf16 in-kernel)
    # w1t_ref: (D, h1)        bf16  (constant index map -> VMEM-resident across steps)
    # w2t_ref: (h1, h2)       bf16
    # w3t_ref: (h2, 128)      bf16  (zero-padded beyond class 10)
    # o_ref:   (TILE_M, 128)  bf16
    x = x_ref[...].astype(jnp.bfloat16)

    # fc1 + relu (f32 accumulate on MXU; ReLU in f32, then back to bf16)
    h1 = jnp.dot(x, w1t_ref[...], preferred_element_type=jnp.float32)
    h1 = jnp.maximum(h1, 0.0).astype(jnp.bfloat16)

    # dropout(p=0.2) -> identity (eval semantics)

    # fc2 + relu
    h2 = jnp.dot(h1, w2t_ref[...], preferred_element_type=jnp.float32)
    h2 = jnp.maximum(h2, 0.0).astype(jnp.bfloat16)

    # dropout(p=0.2) -> identity (eval semantics)

    # fc3 (padded to 128 output lanes)
    logits = jnp.dot(h2, w3t_ref[...], preferred_element_type=jnp.float32)  # (TILE_M, 128) f32

    # Mask padded lanes to a large negative so they contribute ~0 to the softmax.
    lane = jax.lax.broadcasted_iota(jnp.int32, logits.shape, 1)
    logits = jnp.where(lane < NUM_CLASSES, logits, jnp.float32(-1e30))

    # Numerically stable log_softmax along dim=1 (all in f32 -- right path on v5e too).
    m = jnp.max(logits, axis=1, keepdims=True)
    shifted = logits - m
    lse = jnp.log(jnp.sum(jnp.exp(shifted), axis=1, keepdims=True))
    o_ref[...] = (shifted - lse).astype(o_ref.dtype)


def prepare_weights(w1, w2, w3):
    """One-time weight prep (hoisted out of the per-call path).

    w1: (h1, D), w2: (h2, h1), w3: (10, h2) in torch Linear layout.
    Returns pre-transposed bf16 weights, classifier zero-padded to 128 lanes.
    """
    h2 = w2.shape[0]
    w1t = w1.T.astype(jnp.bfloat16)
    w2t = w2.T.astype(jnp.bfloat16)
    w3t = jnp.zeros((h2, PADDED_CLASSES), jnp.bfloat16)
    w3t = w3t.at[:, :NUM_CLASSES].set(w3.T.astype(jnp.bfloat16))
    return w1t, w2t, w3t


def _pick_tile(n, tile_m):
    """Batch tile: whole batch if small; else multiple of 256, capped so the grid has
    at least 2 steps (megacore sharding on v7x), capped at tile_m."""
    if n <= 256:
        return n  # single block; block dim == full array dim is always legal
    tm = min(tile_m, _round_up((n + 1) // 2, 256))
    return max(tm, 256)


def mlp_forward(x, w1t, w2t, w3t, tile_m=2048, x_buffers=2):
    """x: (B, C, H, W) fp16/bf16/f32; weights from prepare_weights().

    Compute runs in bf16 with f32 MXU accumulation; result cast back to x.dtype.
    """
    input_dim, h1 = w1t.shape
    h2 = w3t.shape[0]
    out_dtype = x.dtype

    # x.view(-1, input_dim). bf16/f32 inputs stream straight into the kernel (the bf16
    # cast happens in-kernel, no extra HBM pre-pass). fp16 is cast here because Mosaic
    # fp16 VMEM refs are not guaranteed on all TPU generations.
    x2d = x.reshape(-1, input_dim)
    if x2d.dtype == jnp.float16:
        x2d = x2d.astype(jnp.bfloat16)
    n = x2d.shape[0]

    tm = _pick_tile(n, tile_m)
    grid = (pl.cdiv(n, tm),)  # ragged last tile OK: OOB output rows are masked

    # VMEM sanity (documented rather than shrinking tiles for v7x): double-buffered
    # x + out tiles plus resident weights must fit the 32 MiB scoped default.
    vmem_bytes = (2 * tm * (input_dim * x2d.dtype.itemsize + PADDED_CLASSES * 2)
                  + 2 * 2 * (w1t.size + w2t.size + w3t.size))
    assert vmem_bytes < 32 * 1024 * 1024, "raise vmem_limit_bytes before using such tiles"

    # x tile spec; deepen buffering only if profiling shows exposed x-tile DMA.
    if x_buffers > 2:
        x_spec = pl.BlockSpec((tm, input_dim), lambda i: (i, 0),
                              pipeline_mode=pl.Buffered(x_buffers))
    else:
        x_spec = pl.BlockSpec((tm, input_dim), lambda i: (i, 0))

    flops = 2 * n * (input_dim * h1 + h1 * h2 + h2 * PADDED_CLASSES)
    bytes_accessed = (x2d.size * x2d.dtype.itemsize
                      + 2 * (w1t.size + w2t.size + w3t.size)
                      + 2 * n * PADDED_CLASSES)

    out = pl.pallas_call(
        mlp_kernel,
        out_shape=jax.ShapeDtypeStruct((n, PADDED_CLASSES), jnp.bfloat16),
        grid_spec=pl.GridSpec(
            grid=grid,
            in_specs=[
                # x: one batch tile per grid step (pipelined DMA).
                x_spec,
                # Weights: constant block index -> fetched once, VMEM-resident.
                pl.BlockSpec((input_dim, h1), lambda i: (0, 0)),
                pl.BlockSpec((h1, h2), lambda i: (0, 0)),
                pl.BlockSpec((h2, PADDED_CLASSES), lambda i: (0, 0)),
            ],
            out_specs=pl.BlockSpec((tm, PADDED_CLASSES), lambda i: (i, 0)),
        ),
        compiler_params=pltpu.CompilerParams(
            dimension_semantics=("parallel",)),
        cost_estimate=pl.CostEstimate(
            flops=flops,
            transcendentals=n * PADDED_CLASSES,
            bytes_accessed=bytes_accessed),
    )(x2d, w1t, w2t, w3t)

    # Drop padded class lanes; match the caller's dtype.
    return out[:, :NUM_CLASSES].astype(out_dtype)


def init_linear_weight(key, out_dim, in_dim, dtype=jnp.float16):
    # torch.nn.Linear default init: U(-1/sqrt(in), 1/sqrt(in))
    bound = 1.0 / (in_dim ** 0.5)
    w = jax.random.uniform(key, (out_dim, in_dim), jnp.float32,
                           minval=-bound, maxval=bound)
    return w.astype(dtype)


if __name__ == "__main__":
    # Small MNIST-like shapes: batch=8, 1x16x16 images -> input_dim=256
    batch, channels, spatial = 8, 1, 16
    input_dim = channels * spatial * spatial   # 256
    hidden1, hidden2 = 128, 64

    key = jax.random.PRNGKey(0)
    kx, k1, k2, k3, kxb = jax.random.split(key, 5)

    x = jax.random.normal(kx, (batch, channels, spatial, spatial),
                          jnp.float32).astype(jnp.float16)
    w1 = init_linear_weight(k1, hidden1, input_dim)
    w2 = init_linear_weight(k2, hidden2, hidden1)
    w3 = init_linear_weight(k3, 10, hidden2)

    # Weight prep hoisted out of the forward path (computed once).
    params = prepare_weights(w1, w2, w3)

    out = mlp_forward(x, *params)
    out = jax.block_until_ready(out)
    assert out.shape == (batch, 10)

    # Sanity: log_softmax rows exponentiate-sum to ~1.
    row_sums = jnp.sum(jnp.exp(out.astype(jnp.float32)), axis=1)
    assert bool(jnp.all(jnp.abs(row_sums - 1.0) < 2e-2))

    # Plain-JAX reference (same bf16 compute / f32 accumulation path).
    def ref_forward(xr):
        xr = xr.reshape(-1, input_dim).astype(jnp.bfloat16)
        a1 = jnp.maximum(jnp.dot(xr, w1.T.astype(jnp.bfloat16),
                                 preferred_element_type=jnp.float32), 0.0).astype(jnp.bfloat16)
        a2 = jnp.maximum(jnp.dot(a1, w2.T.astype(jnp.bfloat16),
                                 preferred_element_type=jnp.float32), 0.0).astype(jnp.bfloat16)
        lg = jnp.dot(a2, w3.T.astype(jnp.bfloat16), preferred_element_type=jnp.float32)
        # Quantize through bf16 to match the kernel's bf16 output storage.
        return jax.nn.log_softmax(lg, axis=1).astype(jnp.bfloat16).astype(jnp.float32)

    ref = ref_forward(x)
    assert bool(jnp.max(jnp.abs(out.astype(jnp.float32) - ref)) < 3e-2)

    # Larger batch exercises the multi-step grid (megacore-shardable) and the
    # ragged last tile (300 rows -> tm=256, grid=2, 44 valid rows in the last block).
    big_batch = 300
    xb = jax.random.normal(kxb, (big_batch, channels, spatial, spatial),
                           jnp.float32).astype(jnp.float16)
    outb = jax.block_until_ready(mlp_forward(xb, *params))
    assert outb.shape == (big_batch, 10)
    refb = ref_forward(xb)
    assert bool(jnp.max(jnp.abs(outb.astype(jnp.float32) - refb)) < 3e-2)

    print("KERNEL_OK")
</pallas_src>

<mosaic_0001>
module attributes {stable_mosaic.version = 11 : i64} {
  func.func @mlp_kernel(%arg0: i32, %arg1: memref<8x256xbf16, #tpu.memory_space<vmem>>, %arg2: memref<256x128xbf16, #tpu.memory_space<vmem>>, %arg3: memref<128x64xbf16, #tpu.memory_space<vmem>>, %arg4: memref<64x128xbf16, #tpu.memory_space<vmem>>, %arg5: memref<8x128xbf16, #tpu.memory_space<vmem>>) attributes {dimension_semantics = [#tpu.dimension_semantics<parallel>], iteration_bounds = array<i64: 1>, scalar_prefetch = 0 : i64, scratch_operands = 0 : i64, tpu.core_type = #tpu.core_type<tc>, window_params = [{transform_indices = @transform_0, window_bounds = array<i64: 8, 256>}, {pipeline_mode = #tpu.pipeline_mode<synchronous>, transform_indices = @transform_1, window_bounds = array<i64: 256, 128>}, {pipeline_mode = #tpu.pipeline_mode<synchronous>, transform_indices = @transform_2, window_bounds = array<i64: 128, 64>}, {pipeline_mode = #tpu.pipeline_mode<synchronous>, transform_indices = @transform_3, window_bounds = array<i64: 64, 128>}, {transform_indices = @transform_4, window_bounds = array<i64: 8, 128>}]} {
    %c0 = arith.constant 0 : index
    %c0_0 = arith.constant 0 : index
    %0 = vector.load %arg1[%c0, %c0_0] : memref<8x256xbf16, #tpu.memory_space<vmem>>, vector<8x256xbf16>
    %c0_1 = arith.constant 0 : index
    %c0_2 = arith.constant 0 : index
    %1 = vector.load %arg2[%c0_1, %c0_2] : memref<256x128xbf16, #tpu.memory_space<vmem>>, vector<256x128xbf16>
    %cst = arith.constant dense<0.000000e+00> : vector<8x128xf32>
    %2 = tpu.matmul %0, %1, %cst {dimension_numbers = #tpu.dot_dimension_numbers<[1], [0], [0], [1], [0, 0, 1, 1], [], []>} : vector<8x256xbf16>, vector<256x128xbf16>, vector<8x128xf32> -> vector<8x128xf32>
    %cst_3 = arith.constant 0.000000e+00 : f32
    %3 = vector.broadcast %cst_3 : f32 to vector<8x128xf32>
    %4 = arith.maximumf %2, %3 : vector<8x128xf32>
    %5 = arith.truncf %4 : vector<8x128xf32> to vector<8x128xbf16>
    %c0_4 = arith.constant 0 : index
    %c0_5 = arith.constant 0 : index
    %6 = vector.load %arg3[%c0_4, %c0_5] : memref<128x64xbf16, #tpu.memory_space<vmem>>, vector<128x64xbf16>
    %cst_6 = arith.constant dense<0.000000e+00> : vector<8x64xf32>
    %7 = tpu.matmul %5, %6, %cst_6 {dimension_numbers = #tpu.dot_dimension_numbers<[1], [0], [0], [1], [0, 0, 1, 1], [], []>} : vector<8x128xbf16>, vector<128x64xbf16>, vector<8x64xf32> -> vector<8x64xf32>
    %cst_7 = arith.constant 0.000000e+00 : f32
    %8 = vector.broadcast %cst_7 : f32 to vector<8x64xf32>
    %9 = arith.maximumf %7, %8 : vector<8x64xf32>
    %10 = arith.truncf %9 : vector<8x64xf32> to vector<8x64xbf16>
    %c0_8 = arith.constant 0 : index
    %c0_9 = arith.constant 0 : index
    %11 = vector.load %arg4[%c0_8, %c0_9] : memref<64x128xbf16, #tpu.memory_space<vmem>>, vector<64x128xbf16>
    %cst_10 = arith.constant dense<0.000000e+00> : vector<8x128xf32>
    %12 = tpu.matmul %10, %11, %cst_10 {dimension_numbers = #tpu.dot_dimension_numbers<[1], [0], [0], [1], [0, 0, 1, 1], [], []>} : vector<8x64xbf16>, vector<64x128xbf16>, vector<8x128xf32> -> vector<8x128xf32>
    %13 = tpu.iota {dimensions = array<i32: 1>} : vector<8x128xi32>
    %c10_i32 = arith.constant 10 : i32
    %14 = vector.broadcast %c10_i32 : i32 to vector<8x128xi32>
    %15 = arith.cmpi slt, %13, %14 : vector<8x128xi32>
    %cst_11 = arith.constant -1.000000e+30 : f32
    %16 = vector.broadcast %cst_11 : f32 to vector<8x128xf32>
    %17 = arith.select %15, %12, %16 : vector<8x128xi1>, vector<8x128xf32>
    %cst_12 = arith.constant dense<0xFF800000> : vector<8xf32>
    %18 = vector.multi_reduction <maximumf>, %17, %cst_12 [1] : vector<8x128xf32> to vector<8xf32>
    %19 = vector.shape_cast %18 : vector<8xf32> to vector<8x1xf32>
    %20 = vector.broadcast %19 : vector<8x1xf32> to vector<8x128xf32>
    %21 = arith.subf %17, %20 : vector<8x128xf32>
    %22 = math.exp %21 : vector<8x128xf32>
    %cst_13 = arith.constant dense<0.000000e+00> : vector<8xf32>
    %23 = vector.multi_reduction <add>, %22, %cst_13 [1] : vector<8x128xf32> to vector<8xf32>
    %24 = vector.shape_cast %23 : vector<8xf32> to vector<8x1xf32>
    %25 = math.log %24 : vector<8x1xf32>
    %26 = vector.broadcast %25 : vector<8x1xf32> to vector<8x128xf32>
    %27 = arith.subf %21, %26 : vector<8x128xf32>
    %28 = arith.truncf %27 : vector<8x128xf32> to vector<8x128xbf16>
    %c0_14 = arith.constant 0 : index
    %c0_15 = arith.constant 0 : index
    %29 = vector.load %arg5[%c0_14, %c0_15] : memref<8x128xbf16, #tpu.memory_space<vmem>>, vector<8x128xbf16>
    tpu.vector_store %arg5[%c0_14, %c0_15], %28 {strides = array<i32>} : memref<8x128xbf16, #tpu.memory_space<vmem>>, vector<8x128xbf16>,
    return
  }
  func.func @transform_0(%arg0: i32) -> (i32, i32) {
    %c0_i32 = arith.constant 0 : i32
    %c0_i32_0 = arith.constant 0 : i32
    return %arg0, %c0_i32 : i32, i32
  }
  func.func @transform_1(%arg0: i32) -> (i32, i32) {
    %c0_i32 = arith.constant 0 : i32
    %c0_i32_0 = arith.constant 0 : i32
    %c0_i32_1 = arith.constant 0 : i32
    return %c0_i32, %c0_i32_0 : i32, i32
  }
  func.func @transform_2(%arg0: i32) -> (i32, i32) {
    %c0_i32 = arith.constant 0 : i32
    %c0_i32_0 = arith.constant 0 : i32
    %c0_i32_1 = arith.constant 0 : i32
    return %c0_i32, %c0_i32_0 : i32, i32
  }
  func.func @transform_3(%arg0: i32) -> (i32, i32) {
    %c0_i32 = arith.constant 0 : i32
    %c0_i32_0 = arith.constant 0 : i32
    %c0_i32_1 = arith.constant 0 : i32
    return %c0_i32, %c0_i32_0 : i32, i32
  }
  func.func @transform_4(%arg0: i32) -> (i32, i32) {
    %c0_i32 = arith.constant 0 : i32
    %c0_i32_0 = arith.constant 0 : i32
    return %arg0, %c0_i32 : i32, i32
  }
}

</mosaic_0001>

<llo_original>
// kernel: tpu_custom_call.1
$region0: #{tpu_custom_call.1}
  #allocation0 [shape = 'u32[]', space=smem, size = 0x4, offset = 0x4, fixed_abs, tag = 'smem constant byte address 0x4 - core index']
  #allocation1 [shape = 'u32[72,128]{1,0:T(1,128)}', space=vmem, size = 0x9000, scoped, tag = 'internal scratch']
  %s0 = inlined_call_operand.vmem [shape: bf16[8,256], index: 0, kind: input, shape index: {}]
  %s1 = inlined_call_operand.hbm [shape: bf16[256,128], index: 1, kind: input, shape index: {}]
  %s2 = inlined_call_operand.vmem [shape: bf16[128,64], index: 2, kind: input, shape index: {}]
  %s3 = inlined_call_operand.vmem [shape: bf16[64,128], index: 3, kind: input, shape index: {}]
  %s4 = inlined_call_operand.hbm [shape: bf16[8,128], index: 4, kind: output, shape index: {}]
  %s5 = sld [smem:[#allocation0]]
  $region30: #{tpu_custom_call.1} parent=0
    _
  %s7 = ssub.s32 1, %s5
  %s8 = scalar_select 0, %s7, %s5
  $region1: #{tpu_custom_call.1} parent=0
    #allocation2 [shape = 'u8[65536]{0}', space=vmem, size = 0x10000, scoped, tag = 'input window, operand 1, single buffered']
    #allocation3 [shape = 's32[1]{0}', space=sflag, size = 0x4, scoped, tag = 'scoped memory for tpu_custom_call.1']
    #allocation4 [shape = 's32[1]{0}', space=sflag, size = 0x4, scoped, tag = 'scoped memory for tpu_custom_call.1']
    #allocation5 [shape = 'u8[2048]{0}', space=vmem, size = 0x800, scoped, tag = 'output window, operand 0, single buffered']
    %9 = vsyncpa [#allocation3], 0
    %10 = vsyncpa [#allocation4], 0
    // Predicated region
    $region2: #{tpu_custom_call.1} parent=1 // pred_check
      _
    $region3: #{tpu_custom_call.1} parent=1 // pred_check_branch
      %12 = sbr.rel (0) target = $region5
    $region4: #{tpu_custom_call.1} parent=1 // pred_region
      _
    $region5: #{tpu_custom_call.1} parent=1 // pred_fallthru
      _
    // Predicated region
    $region6: #{tpu_custom_call.1} parent=1 // pred_check
      _
    $region7: #{tpu_custom_call.1} parent=1 // pred_check_branch
      %14 = sbr.rel (0) target = $region9
    $region8: #{tpu_custom_call.1} parent=1 // pred_region
      %16 = vsyncadd [#allocation3], 0
      %s17 = sshll.u32 %s1, 4
      %s18 = int_to_ptr.hbm [resolvable:$true] %s17
      %s19 = sshll.u32 [#allocation2], 4
      %s20 = int_to_ptr.vmem [resolvable:$true] %s19
      %25 = dma.hbm_to_vmem [thread:$0]  %s18, 2048, %s20, [#allocation3], 64, 64, 4
    $region9: #{tpu_custom_call.1} parent=1 // pred_fallthru
      _
    // Predicated region
    $region10: #{tpu_custom_call.1} parent=1 // pred_check
      _
    $region11: #{tpu_custom_call.1} parent=1 // pred_check_branch
      %27 = sbr.rel (0) target = $region13
    $region12: #{tpu_custom_call.1} parent=1 // pred_region
      _
    $region13: #{tpu_custom_call.1} parent=1 // pred_fallthru
      _
    // Predicated region
    $region14: #{tpu_custom_call.1} parent=1 // pred_check
      _
    $region15: #{tpu_custom_call.1} parent=1 // pred_check_branch
      %29 = sbr.rel (0) target = $region17
    $region16: #{tpu_custom_call.1} parent=1 // pred_region
      _
    $region17: #{tpu_custom_call.1} parent=1 // pred_fallthru
      _
    // Predicated region
    $region18: #{tpu_custom_call.1} parent=1 // pred_check
      _
    $region19: #{tpu_custom_call.1} parent=1 // pred_check_branch
      %31 = sbr.rel (0) target = $region21
    $region20: #{tpu_custom_call.1} parent=1 // pred_region
      %33 = dma.done [#allocation3], 2048
    $region21: #{tpu_custom_call.1} parent=1 // pred_fallthru
      _
    %v35 = vld [vmem:[%s0] sm:$0xff]
    %v36 = vld [vmem:[#allocation2] sm:$0xf]
    %v37 = vld [vmem:[#allocation2 + $0x4] sm:$0xf]
    %v38 = vld [vmem:[#allocation2 + $0x8] sm:$0xf]
    %v39 = vld [vmem:[#allocation2 + $0xc] sm:$0xf]
    %v40 = vld [vmem:[#allocation2 + $0x10] sm:$0xf]
    %v41 = vld [vmem:[#allocation2 + $0x14] sm:$0xf]
    %v42 = vld [vmem:[#allocation2 + $0x18] sm:$0xf]
    %v43 = vld [vmem:[#allocation2 + $0x1c] sm:$0xf]
    %v44 = vld [vmem:[#allocation2 + $0x20] sm:$0xf]
    %v45 = vld [vmem:[#allocation2 + $0x24] sm:$0xf]
    %v46 = vld [vmem:[#allocation2 + $0x28] sm:$0xf]
    %v47 = vld [vmem:[#allocation2 + $0x2c] sm:$0xf]
    %v48 = vld [vmem:[#allocation2 + $0x30] sm:$0xf]
    %v49 = vld [vmem:[#allocation2 + $0x34] sm:$0xf]
    %v50 = vld [vmem:[#allocation2 + $0x38] sm:$0xf]
    %v51 = vld [vmem:[#allocation2 + $0x3c] sm:$0xf]
    %v52 = vld [vmem:[#allocation2 + $0x40] sm:$0xf]
    %v53 = vld [vmem:[#allocation2 + $0x44] sm:$0xf]
    %v54 = vld [vmem:[#allocation2 + $0x48] sm:$0xf]
    %v55 = vld [vmem:[#allocation2 + $0x4c] sm:$0xf]
    %v56 = vld [vmem:[#allocation2 + $0x50] sm:$0xf]
    %v57 = vld [vmem:[#allocation2 + $0x54] sm:$0xf]
    %v58 = vld [vmem:[#allocation2 + $0x58] sm:$0xf]
    %v59 = vld [vmem:[#allocation2 + $0x5c] sm:$0xf]
    %v60 = vld [vmem:[#allocation2 + $0x60] sm:$0xf]
    %v61 = vld [vmem:[#allocation2 + $0x64] sm:$0xf]
    %v62 = vld [vmem:[#allocation2 + $0x68] sm:$0xf]
    %v63 = vld [vmem:[#allocation2 + $0x6c] sm:$0xf]
    %v64 = vld [vmem:[#allocation2 + $0x70] sm:$0xf]
    %v65 = vld [vmem:[#allocation2 + $0x74] sm:$0xf]
    %v66 = vld [vmem:[#allocation2 + $0x78] sm:$0xf]
    %v67 = vld [vmem:[#allocation2 + $0x7c] sm:$0xf]
    %v69 = vunpack.c.l.b16 %v35
    %v70 = vunpack.c.h.b16 %v35
    %v71 = vpack.c.b16 %v69, %v69
    %v72 = vpack.c.b16 %v70, %v70
    %v107 = vunpack.c.l.b16 %v36
    %v108 = vunpack.c.l.b16 %v37
    %v109 = vunpack.c.l.b16 %v38
    %v110 = vunpack.c.l.b16 %v39
    %v111 = vunpack.c.l.b16 %v40
    %v112 = vunpack.c.l.b16 %v41
    %v113 = vunpack.c.l.b16 %v42
    %v114 = vunpack.c.l.b16 %v43
    %v115 = vunpack.c.l.b16 %v44
    %v116 = vunpack.c.l.b16 %v45
    %v117 = vunpack.c.l.b16 %v46
    %v118 = vunpack.c.l.b16 %v47
    %v119 = vunpack.c.l.b16 %v48
    %v120 = vunpack.c.l.b16 %v49
    %v121 = vunpack.c.l.b16 %v50
    %v122 = vunpack.c.l.b16 %v51
    %v123 = vunpack.c.l.b16 %v52
    %v124 = vunpack.c.l.b16 %v53
    %v125 = vunpack.c.l.b16 %v54
    %v126 = vunpack.c.l.b16 %v55
    %v127 = vunpack.c.l.b16 %v56
    %v128 = vunpack.c.l.b16 %v57
    %v129 = vunpack.c.l.b16 %v58
    %v130 = vunpack.c.l.b16 %v59
    %v131 = vunpack.c.l.b16 %v60
    %v132 = vunpack.c.l.b16 %v61
    %v133 = vunpack.c.l.b16 %v62
    %v134 = vunpack.c.l.b16 %v63
    %v135 = vunpack.c.l.b16 %v64
    %v136 = vunpack.c.l.b16 %v65
    %v137 = vunpack.c.l.b16 %v66
    %v138 = vunpack.c.l.b16 %v67
    %v139 = vpack.c.b16 %v108, %v107
    %v140 = vpack.c.b16 %v110, %v109
    %v141 = vpack.c.b16 %v112, %v111
    %v142 = vpack.c.b16 %v114, %v113
    %v143 = vpack.c.b16 %v116, %v115
    %v144 = vpack.c.b16 %v118, %v117
    %v145 = vpack.c.b16 %v120, %v119
    %v146 = vpack.c.b16 %v122, %v121
    %v147 = vpack.c.b16 %v124, %v123
    %v148 = vpack.c.b16 %v126, %v125
    %v149 = vpack.c.b16 %v128, %v127
    %v150 = vpack.c.b16 %v130, %v129
    %v151 = vpack.c.b16 %v132, %v131
    %v152 = vpack.c.b16 %v134, %v133
    %v153 = vpack.c.b16 %v136, %v135
    %v154 = vpack.c.b16 %v138, %v137
    %171 = vmatpush.bf16.msra.mxu0 %v146
    %172 = vmatpush.bf16.msra.mxu0 %v145
    %173 = vmatpush.bf16.msra.mxu0 %v144
    %174 = vmatpush.bf16.msra.mxu0 %v143
    %175 = vmatpush.bf16.msra.mxu0 %v142
    %176 = vmatpush.bf16.msra.mxu0 %v141
    %177 = vmatpush.bf16.msra.mxu0 %v140
    %178 = vmatpush.bf16.msra.mxu0 %v139
    %179 = vmatmul.bf16.gmra.mxu0 %v71
    %v180 = vpop.f32.mrf.mxu0
    %v181 = vadd.f32 0.0, %v180
    %v182 = vpop.f32.mrf.mxu0
    %183 = vdwg.mxu0
    %184 = vmatpush.bf16.msra.mxu0 %v154
    %185 = vmatpush.bf16.msra.mxu0 %v153
    %186 = vmatpush.bf16.msra.mxu0 %v152
    %187 = vmatpush.bf16.msra.mxu0 %v151
    %188 = vmatpush.bf16.msra.mxu0 %v150
    %189 = vmatpush.bf16.msra.mxu0 %v149
    %190 = vmatpush.bf16.msra.mxu0 %v148
    %191 = vmatpush.bf16.msra.mxu0 %v147
    %192 = vmatmul.bf16.gmra.mxu0 %v72
    %v193 = vpop.f32.mrf.mxu0
    %v194 = vadd.f32 %v181, %v193
    %v195 = vpop.f32.mrf.mxu0
    %196 = vdwg.mxu0
    %v197 = vmax.f32 %v194, 0.0
    %v198 = vpack.c.bf16 %v197, %v197
    %v199 = vld [vmem:[%s2] sm:$0xf]
    %v200 = vld [vmem:[%s2 + $0x4] sm:$0xf]
    %v201 = vld [vmem:[%s2 + $0x8] sm:$0xf]
    %v202 = vld [vmem:[%s2 + $0xc] sm:$0xf]
    %v203 = vld [vmem:[%s2 + $0x10] sm:$0xf]
    %v204 = vld [vmem:[%s2 + $0x14] sm:$0xf]
    %v205 = vld [vmem:[%s2 + $0x18] sm:$0xf]
    %v206 = vld [vmem:[%s2 + $0x1c] sm:$0xf]
    %v207 = vld [vmem:[%s2 + $0x20] sm:$0xf]
    %v208 = vld [vmem:[%s2 + $0x24] sm:$0xf]
    %v209 = vld [vmem:[%s2 + $0x28] sm:$0xf]
    %v210 = vld [vmem:[%s2 + $0x2c] sm:$0xf]
    %v211 = vld [vmem:[%s2 + $0x30] sm:$0xf]
    %v212 = vld [vmem:[%s2 + $0x34] sm:$0xf]
    %v213 = vld [vmem:[%s2 + $0x38] sm:$0xf]
    %v214 = vld [vmem:[%s2 + $0x3c] sm:$0xf]
    %v231 = vunpack.c.l.b16 %v199
    %v232 = vunpack.c.l.b16 %v200
    %v233 = vunpack.c.l.b16 %v201
    %v234 = vunpack.c.l.b16 %v202
    %v235 = vunpack.c.l.b16 %v203
    %v236 = vunpack.c.l.b16 %v204
    %v237 = vunpack.c.l.b16 %v205
    %v238 = vunpack.c.l.b16 %v206
    %v239 = vunpack.c.l.b16 %v207
    %v240 = vunpack.c.l.b16 %v208
    %v241 = vunpack.c.l.b16 %v209
    %v242 = vunpack.c.l.b16 %v210
    %v243 = vunpack.c.l.b16 %v211
    %v244 = vunpack.c.l.b16 %v212
    %v245 = vunpack.c.l.b16 %v213
    %v246 = vunpack.c.l.b16 %v214
    %v247 = vpack.c.b16 %v232, %v231
    %v248 = vpack.c.b16 %v234, %v233
    %v249 = vpack.c.b16 %v236, %v235
    %v250 = vpack.c.b16 %v238, %v237
    %v251 = vpack.c.b16 %v240, %v239
    %v252 = vpack.c.b16 %v242, %v241
    %v253 = vpack.c.b16 %v244, %v243
    %v254 = vpack.c.b16 %v246, %v245
    %263 = vmatpush.bf16.msra.mxu0 %v254
    %264 = vmatpush.bf16.msra.mxu0 %v253
    %265 = vmatpush.bf16.msra.mxu0 %v252
    %266 = vmatpush.bf16.msra.mxu0 %v251
    %267 = vmatpush.bf16.msra.mxu0 %v250
    %268 = vmatpush.bf16.msra.mxu0 %v249
    %269 = vmatpush.bf16.msra.mxu0 %v248
    %270 = vmatpush.bf16.msra.mxu0 %v247
    %271 = vmatmul.bf16.gmra.mxu0 %v198
    %v272 = vpop.f32.mrf.mxu0
    %v273 = vadd.f32 0.0, %v272
    %v274 = vpop.f32.mrf.mxu0
    %275 = vdwg.mxu0
    %v276 = vmax.f32 %v273, 0.0
    %v277 = vpack.c.bf16 %v276, %v276
    %v278 = vld [vmem:[%s3] sm:$0xf]
    %v279 = vld [vmem:[%s3 + $0x4] sm:$0xf]
    %v280 = vld [vmem:[%s3 + $0x8] sm:$0xf]
    %v281 = vld [vmem:[%s3 + $0xc] sm:$0xf]
    %v282 = vld [vmem:[%s3 + $0x10] sm:$0xf]
    %v283 = vld [vmem:[%s3 + $0x14] sm:$0xf]
    %v284 = vld [vmem:[%s3 + $0x18] sm:$0xf]
    %v285 = vld [vmem:[%s3 + $0x1c] sm:$0xf]
    %v294 = vunpack.c.l.b16 %v278
    %v295 = vunpack.c.l.b16 %v279
    %v296 = vunpack.c.l.b16 %v280
    %v297 = vunpack.c.l.b16 %v281
    %v298 = vunpack.c.l.b16 %v282
    %v299 = vunpack.c.l.b16 %v283
    %v300 = vunpack.c.l.b16 %v284
    %v301 = vunpack.c.l.b16 %v285
    %v302 = vpack.c.b16 %v295, %v294
    %v303 = vpack.c.b16 %v297, %v296
    %v304 = vpack.c.b16 %v299, %v298
    %v305 = vpack.c.b16 %v301, %v300
    %vm310 = vcmask 523264
    %v312 = vsel %vm310, %v277, 0
    %314 = vmatpush.bf16.msra.mxu0 0
    %315 = vmatpush.bf16.msra.mxu0 0
    %316 = vmatpush.bf16.msra.mxu0 0
    %317 = vmatpush.bf16.msra.mxu0 0
    %318 = vmatpush.bf16.msra.mxu0 %v305
    %319 = vmatpush.bf16.msra.mxu0 %v304
    %320 = vmatpush.bf16.msra.mxu0 %v303
    %321 = vmatpush.bf16.msra.mxu0 %v302
    %322 = vmatmul.bf16.gmra.mxu0 %v312
    %v323 = vpop.f32.mrf.mxu0
    %v324 = vadd.f32 0.0, %v323
    %v325 = vpop.f32.mrf.mxu0
    %326 = vdwg.mxu0
    %v327 = vlaneseq
    %v328 = vand.u32 %v327, 127
    %vm329 = vcmp.lt.s32.totalorder %v328, 10
    %v330 = vsel %vm329, %v324, -1e+30
    %331 = vmax.xlane.f32.xlu0 %v330
    %v332 = vpop.xlane.xlu0 %331
    %v333 = vsub.f32 %v330, %v332
    %v334 = vmul.f32 %v333, 1.442695
    %v335 = vpow.pop %v334
    %336 = vadd.xlane.f32.xlu0 %v335
    %v337 = vpop.xlane.xlu0 %336
    %v338 = vlog2.pop %v337
    %v339 = vmul.f32 %v338, 0.6931472
    %v340 = vsub.f32 %v333, %v339
    %v341 = vpack.c.bf16 %v340, %v340
    %342 = vst [vmem:[#allocation5] sm:$0xf] %v341
    // Predicated region
    $region22: #{tpu_custom_call.1} parent=1 // pred_check
      _
    $region23: #{tpu_custom_call.1} parent=1 // pred_check_branch
      %344 = sbr.rel (0) target = $region25
    $region24: #{tpu_custom_call.1} parent=1 // pred_region
      %346 = vsyncadd [#allocation4], 0
      %s348 = sshll.u32 [#allocation5], 4
      %s349 = int_to_ptr.vmem [resolvable:$true] %s348
      %s350 = sshll.u32 %s4, 4
      %s351 = int_to_ptr.hbm [resolvable:$true] %s350
      %353 = dma.vmem_to_hbm [thread:$0]  %s349, 64, %s351, [#allocation4]
    $region25: #{tpu_custom_call.1} parent=1 // pred_fallthru
      _
    // Predicated region
    $region26: #{tpu_custom_call.1} parent=1 // pred_check
      _
    $region27: #{tpu_custom_call.1} parent=1 // pred_check_branch
      %355 = sbr.rel (0) target = $region29
    $region28: #{tpu_custom_call.1} parent=1 // pred_region
      %357 = dma.done [#allocation4], 64
    $region29: #{tpu_custom_call.1} parent=1 // pred_fallthru
      _
    %358 = vsyncpa [#allocation3], 1
    %359 = vsyncpa [#allocation4], 1

</llo_original>
